<compile_context>
chip_gen: v5e
topology: v5e:2x2
jax: 0.10.0
libtpu: 0.0.40
codegen_flags: <defaults>
</compile_context>

<pallas_src>
import jax
import jax.numpy as jnp
from jax.experimental import pallas as pl
from jax.experimental.pallas import tpu as pltpu

STATE_SIZE = 4
HIDDEN_SIZE = 32
LANE = 128


def _round_up(n, m):
    return ((n + m - 1) // m) * m


def _softplus(z):
    # Numerically stable softplus (VPU + EUP): max(z, 0) + log1p(exp(-|z|)).
    return jnp.maximum(z, 0.0) + jnp.log1p(jnp.exp(-jnp.abs(z)))


def _barrier_kernel(x_ref, w1_ref, b1_ref, w2_ref, b2_ref,
                    w3_ref, b3_ref, w4_ref, b4_ref, o_ref):
    # Batch-in-lanes layout: every activation is (H, TB) -> full lane density.
    #   x_ref : (4, TB) f32   state tile, batch along lanes
    #   w1_ref: (H, 4),  b1_ref: (H, 1)
    #   w2_ref: (H, H),  b2_ref: (H, 1)
    #   w3_ref: (H, H),  b3_ref: (H, 1)
    #   w4_ref: (H, 1),  b4_ref: (1,) f32 in SMEM
    #   o_ref : (1, TB) f32   lane-dense output tile
    x = x_ref[...]
    w1 = w1_ref[...]

    # --- Layer 1: (H,4) @ (4,TB) unrolled as 4 broadcast FMAs on the VPU
    #     (K=4 would waste an MXU pass).
    h = w1[:, 0:1] * x[0:1, :]
    h = h + w1[:, 1:2] * x[1:2, :]
    h = h + w1[:, 2:3] * x[2:3, :]
    h = h + w1[:, 3:4] * x[3:4, :]
    h = _softplus(h + b1_ref[...])

    # --- Layers 2 & 3: (H,H) @ (H,TB) on the MXU; output lane dim = TB >= 128.
    h = _softplus(
        jnp.dot(w2_ref[...], h, preferred_element_type=jnp.float32) + b2_ref[...])
    h = _softplus(
        jnp.dot(w3_ref[...], h, preferred_element_type=jnp.float32) + b3_ref[...])

    # --- Layer 4: (1,H) @ (H,TB) as broadcast-multiply + sublane reduction
    #     (VPU/XLU), scalar bias from SMEM, approx-reciprocal sigmoid (EUP).
    z = jnp.sum(h * w4_ref[...], axis=0, keepdims=True) + b4_ref[0]
    o_ref[...] = pl.reciprocal(1.0 + jnp.exp(-z), approx=True)


def prepare_params(params):
    """One-time cast/reshape of torch-layout params into the kernel layout."""
    w1, b1, w2, b2, w3, b3, w4, b4 = params
    H = w1.shape[0]
    f32 = jnp.float32
    return (w1.astype(f32),                    # (H, 4)
            b1.astype(f32).reshape(H, 1),
            w2.astype(f32),                    # (H, H)
            b2.astype(f32).reshape(H, 1),
            w3.astype(f32),                    # (H, H)
            b3.astype(f32).reshape(H, 1),
            w4.astype(f32).reshape(H, 1),      # torch (1,H) -> column
            b4.astype(f32).reshape(1))


def barrier_forward(state, prep, *, batch_tile=2048):
    """state: (B, 4) f32; prep = prepare_params(torch-layout params).

    Returns (B, 1) f32 = BarrierNN(state).
    """
    w1, b1, w2, b2, w3, b3, w4, b4 = prep
    B, D = state.shape
    H = w1.shape[0]
    assert D == STATE_SIZE and w1.shape == (H, D)
    assert w2.shape == (H, H) and w3.shape == (H, H) and w4.shape == (H, 1)
    assert batch_tile % LANE == 0

    # Batch lives on the lane axis: pad it to a multiple of the tile so every
    # grid block is full (dense, unmasked stores; no compute on stale VMEM).
    TB = int(min(batch_tile, _round_up(B, LANE)))
    Bp = _round_up(B, TB)
    x = state.astype(jnp.float32).T            # (4, B)
    if Bp != B:
        x = jnp.pad(x, ((0, 0), (0, Bp - B)))

    grid = (Bp // TB,)
    const = lambda i: (0, 0)

    # Advisory cost for XLA's scheduler (transcendental-heavy custom call).
    flops = B * (2 * D * H + 4 * H * H + 10 * H + 4)
    transcendentals = B * (6 * H + 2)
    bytes_accessed = 4 * (B * (D + 1) + D * H + 2 * H * H + 5 * H + 1)

    out = pl.pallas_call(
        _barrier_kernel,
        out_shape=jax.ShapeDtypeStruct((1, Bp), jnp.float32),
        grid=grid,
        in_specs=[
            pl.BlockSpec((D, TB), lambda i: (0, i)),            # state tile
            pl.BlockSpec((H, D), const),                        # W1
            pl.BlockSpec((H, 1), const),                        # b1
            pl.BlockSpec((H, H), const),                        # W2
            pl.BlockSpec((H, 1), const),                        # b2
            pl.BlockSpec((H, H), const),                        # W3
            pl.BlockSpec((H, 1), const),                        # b3
            pl.BlockSpec((H, 1), const),                        # W4 column
            pl.BlockSpec(memory_space=pltpu.MemorySpace.SMEM),  # b4 scalar
        ],
        out_specs=pl.BlockSpec((1, TB), lambda i: (0, i)),
        compiler_params=pltpu.CompilerParams(
            dimension_semantics=("parallel",)),
        cost_estimate=pl.CostEstimate(
            flops=flops, transcendentals=transcendentals,
            bytes_accessed=bytes_accessed),
    )(x, w1, b1, w2, b2, w3, b3, w4, b4)

    return out[0, :B].reshape(B, 1)


def _ref_forward(x, params):
    """Plain-JAX reference (HIGHEST precision matmuls), torch-layout params."""
    w1, b1, w2, b2, w3, b3, w4, b4 = params
    hp = jax.lax.Precision.HIGHEST
    h = jax.nn.softplus(jnp.dot(x, w1.T, precision=hp) + b1)
    h = jax.nn.softplus(jnp.dot(h, w2.T, precision=hp) + b2)
    h = jax.nn.softplus(jnp.dot(h, w3.T, precision=hp) + b3)
    return jax.nn.sigmoid(jnp.dot(h, w4.T, precision=hp) + b4)


if __name__ == "__main__":
    H = HIDDEN_SIZE
    key = jax.random.PRNGKey(0)
    ks = jax.random.split(key, 9)

    # Deterministic parameters mirroring the module's __init__:
    # kaiming_normal (fan_in) for W1..W3, default nn.Linear init for W4/biases.
    std1, stdh = (2.0 / STATE_SIZE) ** 0.5, (2.0 / H) ** 0.5
    bnd1, bndh = 1.0 / STATE_SIZE ** 0.5, 1.0 / H ** 0.5
    w1 = std1 * jax.random.normal(ks[0], (H, STATE_SIZE), jnp.float32)
    b1 = jax.random.uniform(ks[1], (H,), jnp.float32, -bnd1, bnd1)
    w2 = stdh * jax.random.normal(ks[2], (H, H), jnp.float32)
    b2 = jax.random.uniform(ks[3], (H,), jnp.float32, -bndh, bndh)
    w3 = stdh * jax.random.normal(ks[4], (H, H), jnp.float32)
    b3 = jax.random.uniform(ks[5], (H,), jnp.float32, -bndh, bndh)
    w4 = jax.random.uniform(ks[6], (1, H), jnp.float32, -bndh, bndh)
    b4 = jax.random.uniform(ks[7], (1,), jnp.float32, -bndh, bndh)
    params = (w1, b1, w2, b2, w3, b3, w4, b4)
    prep = prepare_params(params)   # cast/reshape once, outside the call

    # Small example input: batch=2 cartpole-style states.
    state = jax.random.normal(ks[8], (2, STATE_SIZE), dtype=jnp.float32)

    out = barrier_forward(state, prep)
    out = jax.block_until_ready(out)

    ref = _ref_forward(state, params)
    assert out.shape == (2, 1)
    # Tolerance covers MXU f32 vs HIGHEST-precision reference plus the
    # EUP approximate-reciprocal in the final sigmoid.
    assert jnp.allclose(out, ref, atol=3e-3, rtol=3e-3), (out, ref)
    assert bool(jnp.all(jnp.isfinite(out)))
    assert bool(jnp.all((out > 0.0) & (out < 1.0)))   # sigmoid range sanity check

    print("KERNEL_OK")
</pallas_src>

<mosaic_0001>
module attributes {stable_mosaic.version = 11 : i64} {
  func.func @_barrier_kernel(%arg0: i32, %arg1: memref<4x128xf32, #tpu.memory_space<vmem>>, %arg2: memref<32x4xf32, #tpu.memory_space<vmem>>, %arg3: memref<32x1xf32, #tpu.memory_space<vmem>>, %arg4: memref<32x32xf32, #tpu.memory_space<vmem>>, %arg5: memref<32x1xf32, #tpu.memory_space<vmem>>, %arg6: memref<32x32xf32, #tpu.memory_space<vmem>>, %arg7: memref<32x1xf32, #tpu.memory_space<vmem>>, %arg8: memref<32x1xf32, #tpu.memory_space<vmem>>, %arg9: memref<1xf32, #tpu.memory_space<smem>>, %arg10: memref<1x128xf32, #tpu.memory_space<vmem>>) attributes {dimension_semantics = [#tpu.dimension_semantics<parallel>], iteration_bounds = array<i64: 1>, scalar_prefetch = 0 : i64, scratch_operands = 0 : i64, tpu.core_type = #tpu.core_type<tc>, window_params = [{transform_indices = @transform_0, window_bounds = array<i64: 4, 128>}, {pipeline_mode = #tpu.pipeline_mode<synchronous>, transform_indices = @transform_1, window_bounds = array<i64: 32, 4>}, {pipeline_mode = #tpu.pipeline_mode<synchronous>, transform_indices = @transform_2, window_bounds = array<i64: 32, 1>}, {pipeline_mode = #tpu.pipeline_mode<synchronous>, transform_indices = @transform_3, window_bounds = array<i64: 32, 32>}, {pipeline_mode = #tpu.pipeline_mode<synchronous>, transform_indices = @transform_4, window_bounds = array<i64: 32, 1>}, {pipeline_mode = #tpu.pipeline_mode<synchronous>, transform_indices = @transform_5, window_bounds = array<i64: 32, 32>}, {pipeline_mode = #tpu.pipeline_mode<synchronous>, transform_indices = @transform_6, window_bounds = array<i64: 32, 1>}, {pipeline_mode = #tpu.pipeline_mode<synchronous>, transform_indices = @transform_7, window_bounds = array<i64: 32, 1>}, {transform_indices = @transform_8, window_bounds = array<i64: 1>}, {transform_indices = @transform_9, window_bounds = array<i64: 1, 128>}]} {
    %c0 = arith.constant 0 : index
    %c0_0 = arith.constant 0 : index
    %0 = vector.load %arg1[%c0, %c0_0] : memref<4x128xf32, #tpu.memory_space<vmem>>, vector<4x128xf32>
    %c0_1 = arith.constant 0 : index
    %c0_2 = arith.constant 0 : index
    %1 = vector.load %arg2[%c0_1, %c0_2] : memref<32x4xf32, #tpu.memory_space<vmem>>, vector<32x4xf32>
    %2 = vector.extract_strided_slice %1 {offsets = [0, 0], sizes = [32, 1], strides = [1, 1]} : vector<32x4xf32> to vector<32x1xf32>
    %3 = vector.extract_strided_slice %0 {offsets = [0, 0], sizes = [1, 128], strides = [1, 1]} : vector<4x128xf32> to vector<1x128xf32>
    %4 = vector.broadcast %2 : vector<32x1xf32> to vector<32x128xf32>
    %5 = vector.broadcast %3 : vector<1x128xf32> to vector<32x128xf32>
    %6 = arith.mulf %4, %5 : vector<32x128xf32>
    %7 = vector.extract_strided_slice %1 {offsets = [0, 1], sizes = [32, 1], strides = [1, 1]} : vector<32x4xf32> to vector<32x1xf32>
    %8 = vector.extract_strided_slice %0 {offsets = [1, 0], sizes = [1, 128], strides = [1, 1]} : vector<4x128xf32> to vector<1x128xf32>
    %9 = vector.broadcast %7 : vector<32x1xf32> to vector<32x128xf32>
    %10 = vector.broadcast %8 : vector<1x128xf32> to vector<32x128xf32>
    %11 = arith.mulf %9, %10 : vector<32x128xf32>
    %12 = arith.addf %6, %11 : vector<32x128xf32>
    %13 = vector.extract_strided_slice %1 {offsets = [0, 2], sizes = [32, 1], strides = [1, 1]} : vector<32x4xf32> to vector<32x1xf32>
    %14 = vector.extract_strided_slice %0 {offsets = [2, 0], sizes = [1, 128], strides = [1, 1]} : vector<4x128xf32> to vector<1x128xf32>
    %15 = vector.broadcast %13 : vector<32x1xf32> to vector<32x128xf32>
    %16 = vector.broadcast %14 : vector<1x128xf32> to vector<32x128xf32>
    %17 = arith.mulf %15, %16 : vector<32x128xf32>
    %18 = arith.addf %12, %17 : vector<32x128xf32>
    %19 = vector.extract_strided_slice %1 {offsets = [0, 3], sizes = [32, 1], strides = [1, 1]} : vector<32x4xf32> to vector<32x1xf32>
    %20 = vector.extract_strided_slice %0 {offsets = [3, 0], sizes = [1, 128], strides = [1, 1]} : vector<4x128xf32> to vector<1x128xf32>
    %21 = vector.broadcast %19 : vector<32x1xf32> to vector<32x128xf32>
    %22 = vector.broadcast %20 : vector<1x128xf32> to vector<32x128xf32>
    %23 = arith.mulf %21, %22 : vector<32x128xf32>
    %24 = arith.addf %18, %23 : vector<32x128xf32>
    %c0_3 = arith.constant 0 : index
    %c0_4 = arith.constant 0 : index
    %25 = vector.load %arg3[%c0_3, %c0_4] : memref<32x1xf32, #tpu.memory_space<vmem>>, vector<32x1xf32>
    %26 = vector.broadcast %25 : vector<32x1xf32> to vector<32x128xf32>
    %27 = arith.addf %24, %26 : vector<32x128xf32>
    %cst = arith.constant 0.000000e+00 : f32
    %28 = vector.broadcast %cst : f32 to vector<32x128xf32>
    %29 = arith.maximumf %27, %28 : vector<32x128xf32>
    %30 = math.absf %27 : vector<32x128xf32>
    %cst_5 = arith.constant 0.000000e+00 : f32
    %31 = vector.broadcast %cst_5 : f32 to vector<32x128xf32>
    %32 = arith.subf %31, %30 : vector<32x128xf32>
    %33 = math.exp %32 : vector<32x128xf32>
    %34 = math.log1p %33 : vector<32x128xf32>
    %35 = arith.addf %29, %34 : vector<32x128xf32>
    %c0_6 = arith.constant 0 : index
    %c0_7 = arith.constant 0 : index
    %36 = vector.load %arg4[%c0_6, %c0_7] : memref<32x32xf32, #tpu.memory_space<vmem>>, vector<32x32xf32>
    %cst_8 = arith.constant dense<0.000000e+00> : vector<32x128xf32>
    %37 = tpu.matmul %36, %35, %cst_8 {dimension_numbers = #tpu.dot_dimension_numbers<[1], [0], [0], [1], [0, 0, 1, 1], [], []>} : vector<32x32xf32>, vector<32x128xf32>, vector<32x128xf32> -> vector<32x128xf32>
    %c0_9 = arith.constant 0 : index
    %c0_10 = arith.constant 0 : index
    %38 = vector.load %arg5[%c0_9, %c0_10] : memref<32x1xf32, #tpu.memory_space<vmem>>, vector<32x1xf32>
    %39 = vector.broadcast %38 : vector<32x1xf32> to vector<32x128xf32>
    %40 = arith.addf %37, %39 : vector<32x128xf32>
    %cst_11 = arith.constant 0.000000e+00 : f32
    %41 = vector.broadcast %cst_11 : f32 to vector<32x128xf32>
    %42 = arith.maximumf %40, %41 : vector<32x128xf32>
    %43 = math.absf %40 : vector<32x128xf32>
    %cst_12 = arith.constant 0.000000e+00 : f32
    %44 = vector.broadcast %cst_12 : f32 to vector<32x128xf32>
    %45 = arith.subf %44, %43 : vector<32x128xf32>
    %46 = math.exp %45 : vector<32x128xf32>
    %47 = math.log1p %46 : vector<32x128xf32>
    %48 = arith.addf %42, %47 : vector<32x128xf32>
    %c0_13 = arith.constant 0 : index
    %c0_14 = arith.constant 0 : index
    %49 = vector.load %arg6[%c0_13, %c0_14] : memref<32x32xf32, #tpu.memory_space<vmem>>, vector<32x32xf32>
    %cst_15 = arith.constant dense<0.000000e+00> : vector<32x128xf32>
    %50 = tpu.matmul %49, %48, %cst_15 {dimension_numbers = #tpu.dot_dimension_numbers<[1], [0], [0], [1], [0, 0, 1, 1], [], []>} : vector<32x32xf32>, vector<32x128xf32>, vector<32x128xf32> -> vector<32x128xf32>
    %c0_16 = arith.constant 0 : index
    %c0_17 = arith.constant 0 : index
    %51 = vector.load %arg7[%c0_16, %c0_17] : memref<32x1xf32, #tpu.memory_space<vmem>>, vector<32x1xf32>
    %52 = vector.broadcast %51 : vector<32x1xf32> to vector<32x128xf32>
    %53 = arith.addf %50, %52 : vector<32x128xf32>
    %cst_18 = arith.constant 0.000000e+00 : f32
    %54 = vector.broadcast %cst_18 : f32 to vector<32x128xf32>
    %55 = arith.maximumf %53, %54 : vector<32x128xf32>
    %56 = math.absf %53 : vector<32x128xf32>
    %cst_19 = arith.constant 0.000000e+00 : f32
    %57 = vector.broadcast %cst_19 : f32 to vector<32x128xf32>
    %58 = arith.subf %57, %56 : vector<32x128xf32>
    %59 = math.exp %58 : vector<32x128xf32>
    %60 = math.log1p %59 : vector<32x128xf32>
    %61 = arith.addf %55, %60 : vector<32x128xf32>
    %c0_20 = arith.constant 0 : index
    %c0_21 = arith.constant 0 : index
    %62 = vector.load %arg8[%c0_20, %c0_21] : memref<32x1xf32, #tpu.memory_space<vmem>>, vector<32x1xf32>
    %63 = vector.broadcast %62 : vector<32x1xf32> to vector<32x128xf32>
    %64 = arith.mulf %61, %63 : vector<32x128xf32>
    %cst_22 = arith.constant dense<0.000000e+00> : vector<128xf32>
    %65 = vector.multi_reduction <add>, %64, %cst_22 [0] : vector<32x128xf32> to vector<128xf32>
    %66 = vector.shape_cast %65 : vector<128xf32> to vector<1x128xf32>
    %c0_23 = arith.constant 0 : index
    %67 = memref.load %arg9[%c0_23] : memref<1xf32, #tpu.memory_space<smem>>
    %68 = vector.broadcast %67 : f32 to vector<1x128xf32>
    %69 = arith.addf %66, %68 : vector<1x128xf32>
    %cst_24 = arith.constant 0.000000e+00 : f32
    %70 = vector.broadcast %cst_24 : f32 to vector<1x128xf32>
    %71 = arith.subf %70, %69 : vector<1x128xf32>
    %72 = math.exp %71 : vector<1x128xf32>
    %cst_25 = arith.constant 1.000000e+00 : f32
    %73 = vector.broadcast %cst_25 : f32 to vector<1x128xf32>
    %74 = arith.addf %73, %72 : vector<1x128xf32>
    %75 = tpu.reciprocal %74 {approx = true} : vector<1x128xf32> -> vector<1x128xf32>
    %c0_26 = arith.constant 0 : index
    %c0_27 = arith.constant 0 : index
    %76 = vector.load %arg10[%c0_26, %c0_27] : memref<1x128xf32, #tpu.memory_space<vmem>>, vector<1x128xf32>
    tpu.vector_store %arg10[%c0_26, %c0_27], %75 {strides = array<i32>} : memref<1x128xf32, #tpu.memory_space<vmem>>, vector<1x128xf32>,
    return
  }
  func.func @transform_0(%arg0: i32) -> (i32, i32) {
    %c0_i32 = arith.constant 0 : i32
    %c0_i32_0 = arith.constant 0 : i32
    return %c0_i32, %arg0 : i32, i32
  }
  func.func @transform_1(%arg0: i32) -> (i32, i32) {
    %c0_i32 = arith.constant 0 : i32
    %c0_i32_0 = arith.constant 0 : i32
    %c0_i32_1 = arith.constant 0 : i32
    return %c0_i32, %c0_i32_0 : i32, i32
  }
  func.func @transform_2(%arg0: i32) -> (i32, i32) {
    %c0_i32 = arith.constant 0 : i32
    %c0_i32_0 = arith.constant 0 : i32
    %c0_i32_1 = arith.constant 0 : i32
    return %c0_i32, %c0_i32_0 : i32, i32
  }
  func.func @transform_3(%arg0: i32) -> (i32, i32) {
    %c0_i32 = arith.constant 0 : i32
    %c0_i32_0 = arith.constant 0 : i32
    %c0_i32_1 = arith.constant 0 : i32
    return %c0_i32, %c0_i32_0 : i32, i32
  }
  func.func @transform_4(%arg0: i32) -> (i32, i32) {
    %c0_i32 = arith.constant 0 : i32
    %c0_i32_0 = arith.constant 0 : i32
    %c0_i32_1 = arith.constant 0 : i32
    return %c0_i32, %c0_i32_0 : i32, i32
  }
  func.func @transform_5(%arg0: i32) -> (i32, i32) {
    %c0_i32 = arith.constant 0 : i32
    %c0_i32_0 = arith.constant 0 : i32
    %c0_i32_1 = arith.constant 0 : i32
    return %c0_i32, %c0_i32_0 : i32, i32
  }
  func.func @transform_6(%arg0: i32) -> (i32, i32) {
    %c0_i32 = arith.constant 0 : i32
    %c0_i32_0 = arith.constant 0 : i32
    %c0_i32_1 = arith.constant 0 : i32
    return %c0_i32, %c0_i32_0 : i32, i32
  }
  func.func @transform_7(%arg0: i32) -> (i32, i32) {
    %c0_i32 = arith.constant 0 : i32
    %c0_i32_0 = arith.constant 0 : i32
    %c0_i32_1 = arith.constant 0 : i32
    return %c0_i32, %c0_i32_0 : i32, i32
  }
  func.func @transform_8(%arg0: i32) -> i32 {
    %c0_i32 = arith.constant 0 : i32
    %c0_i32_0 = arith.constant 0 : i32
    return %c0_i32 : i32
  }
  func.func @transform_9(%arg0: i32) -> (i32, i32) {
    %c0_i32 = arith.constant 0 : i32
    %c0_i32_0 = arith.constant 0 : i32
    return %c0_i32, %arg0 : i32, i32
  }
}

</mosaic_0001>

<llo_original>
// kernel: tpu_custom_call.1
$region0: #{tpu_custom_call.1}
  #allocation0 [shape = 'u32[]', space=smem, size = 0x4, offset = 0x4, fixed_abs, tag = 'smem constant byte address 0x4 - core index']
  #allocation1 [shape = 'u32[72,128]{1,0:T(1,128)}', space=vmem, size = 0x9000, scoped, tag = 'internal scratch']
  #allocation2 [shape = 'f32[1]{0:T(128)S(6)}', space=smem, size = 0x200, scoped, tag = 'scoped memory for tpu_custom_call.1']
  %s0 = inlined_call_operand.vmem [shape: f32[4,128], index: 0, kind: input, shape index: {}]
  %s1 = inlined_call_operand.vmem [shape: f32[32,4], index: 1, kind: input, shape index: {}]
  %s2 = inlined_call_operand.vmem [shape: f32[32,1], index: 2, kind: input, shape index: {}]
  %s3 = inlined_call_operand.vmem [shape: f32[32,32], index: 3, kind: input, shape index: {}]
  %s4 = inlined_call_operand.vmem [shape: f32[32,1], index: 4, kind: input, shape index: {}]
  %s5 = inlined_call_operand.vmem [shape: f32[32,32], index: 5, kind: input, shape index: {}]
  %s6 = inlined_call_operand.vmem [shape: f32[32,1], index: 6, kind: input, shape index: {}]
  %s7 = inlined_call_operand.vmem [shape: f32[32,1], index: 7, kind: input, shape index: {}]
  %s8 = inlined_call_operand.<no memory space> [shape: f32[1], index: 8, kind: input, shape index: {}]
  %s9 = inlined_call_operand.hbm [shape: f32[1,128], index: 9, kind: output, shape index: {}]
  %s10 = sld [smem:[#allocation0]]
  $region46: #{tpu_custom_call.1} parent=0
    _
  %s12 = ssub.s32 1, %s10
  %s13 = scalar_select 0, %s12, %s10
  %14 = sst [smem:[#allocation2]] %s8
  $region1: #{tpu_custom_call.1} parent=0
    #allocation3 [shape = 'u8[512]{0}', space=vmem, size = 0x400, scoped, tag = 'output window, operand 0, single buffered']
    #allocation4 [shape = 's32[1]{0}', space=sflag, size = 0x4, scoped, tag = 'scoped memory for tpu_custom_call.1']
    %15 = vsyncpa [#allocation4], 0
    // Predicated region
    $region2: #{tpu_custom_call.1} parent=1 // pred_check
      _
    $region3: #{tpu_custom_call.1} parent=1 // pred_check_branch
      %17 = sbr.rel (0) target = $region5
    $region4: #{tpu_custom_call.1} parent=1 // pred_region
      _
    $region5: #{tpu_custom_call.1} parent=1 // pred_fallthru
      _
    // Predicated region
    $region6: #{tpu_custom_call.1} parent=1 // pred_check
      _
    $region7: #{tpu_custom_call.1} parent=1 // pred_check_branch
      %19 = sbr.rel (0) target = $region9
    $region8: #{tpu_custom_call.1} parent=1 // pred_region
      _
    $region9: #{tpu_custom_call.1} parent=1 // pred_fallthru
      _
    // Predicated region
    $region10: #{tpu_custom_call.1} parent=1 // pred_check
      _
    $region11: #{tpu_custom_call.1} parent=1 // pred_check_branch
      %21 = sbr.rel (0) target = $region13
    $region12: #{tpu_custom_call.1} parent=1 // pred_region
      _
    $region13: #{tpu_custom_call.1} parent=1 // pred_fallthru
      _
    // Predicated region
    $region14: #{tpu_custom_call.1} parent=1 // pred_check
      _
    $region15: #{tpu_custom_call.1} parent=1 // pred_check_branch
      %23 = sbr.rel (0) target = $region17
    $region16: #{tpu_custom_call.1} parent=1 // pred_region
      _
    $region17: #{tpu_custom_call.1} parent=1 // pred_fallthru
      _
    // Predicated region
    $region18: #{tpu_custom_call.1} parent=1 // pred_check
      _
    $region19: #{tpu_custom_call.1} parent=1 // pred_check_branch
      %25 = sbr.rel (0) target = $region21
    $region20: #{tpu_custom_call.1} parent=1 // pred_region
      _
    $region21: #{tpu_custom_call.1} parent=1 // pred_fallthru
      _
    // Predicated region
    $region22: #{tpu_custom_call.1} parent=1 // pred_check
      _
    $region23: #{tpu_custom_call.1} parent=1 // pred_check_branch
      %27 = sbr.rel (0) target = $region25
    $region24: #{tpu_custom_call.1} parent=1 // pred_region
      _
    $region25: #{tpu_custom_call.1} parent=1 // pred_fallthru
      _
    // Predicated region
    $region26: #{tpu_custom_call.1} parent=1 // pred_check
      _
    $region27: #{tpu_custom_call.1} parent=1 // pred_check_branch
      %29 = sbr.rel (0) target = $region29
    $region28: #{tpu_custom_call.1} parent=1 // pred_region
      _
    $region29: #{tpu_custom_call.1} parent=1 // pred_fallthru
      _
    // Predicated region
    $region30: #{tpu_custom_call.1} parent=1 // pred_check
      _
    $region31: #{tpu_custom_call.1} parent=1 // pred_check_branch
      %31 = sbr.rel (0) target = $region33
    $region32: #{tpu_custom_call.1} parent=1 // pred_region
      _
    $region33: #{tpu_custom_call.1} parent=1 // pred_fallthru
      _
    // Predicated region
    $region34: #{tpu_custom_call.1} parent=1 // pred_check
      _
    $region35: #{tpu_custom_call.1} parent=1 // pred_check_branch
      %33 = sbr.rel (0) target = $region37
    $region36: #{tpu_custom_call.1} parent=1 // pred_region
      _
    $region37: #{tpu_custom_call.1} parent=1 // pred_fallthru
      _
    %v34 = vld [vmem:[%s0] sm:$0xf]
    %v35 = vld [vmem:[%s1] sm:$0xff]
    %v36 = vld [vmem:[%s1 + $0x8] sm:$0xff]
    %v37 = vld [vmem:[%s1 + $0x10] sm:$0xff]
    %v38 = vld [vmem:[%s1 + $0x18] sm:$0xff]
    %40 = vset.pattern.permute.xlu0 0
    %41 = vperm.xlu0 %40, %v35
    %v42 = vpop.permute.xlu0 %41
    %45 = vset.pattern.permute.xlu0 0
    %46 = vperm.xlu0 %45, %v36
    %v47 = vpop.permute.xlu0 %46
    %50 = vset.pattern.permute.xlu0 0
    %51 = vperm.xlu0 %50, %v37
    %v52 = vpop.permute.xlu0 %51
    %55 = vset.pattern.permute.xlu0 0
    %56 = vperm.xlu0 %55, %v38
    %v57 = vpop.permute.xlu0 %56
    %v59 = vperm.slane %v34, 0
    %v60 = vmul.f32 %v42, %v59
    %v61 = vmul.f32 %v47, %v59
    %v62 = vmul.f32 %v52, %v59
    %v63 = vmul.f32 %v57, %v59
    %64 = vset.pattern.permute.xlu0 1
    %65 = vperm.xlu0 %64, %v35
    %v66 = vpop.permute.xlu0 %65
    %68 = vset.pattern.permute.xlu0 1
    %69 = vperm.xlu0 %68, %v36
    %v70 = vpop.permute.xlu0 %69
    %72 = vset.pattern.permute.xlu0 1
    %73 = vperm.xlu0 %72, %v37
    %v74 = vpop.permute.xlu0 %73
    %76 = vset.pattern.permute.xlu0 1
    %77 = vperm.xlu0 %76, %v38
    %v78 = vpop.permute.xlu0 %77
    %v80 = vperm.slane %v34, 1
    %v81 = vmul.f32 %v66, %v80
    %v82 = vmul.f32 %v70, %v80
    %v83 = vmul.f32 %v74, %v80
    %v84 = vmul.f32 %v78, %v80
    %v85 = vadd.f32 %v60, %v81
    %v86 = vadd.f32 %v61, %v82
    %v87 = vadd.f32 %v62, %v83
    %v88 = vadd.f32 %v63, %v84
    %89 = vset.pattern.permute.xlu0 2
    %90 = vperm.xlu0 %89, %v35
    %v91 = vpop.permute.xlu0 %90
    %93 = vset.pattern.permute.xlu0 2
    %94 = vperm.xlu0 %93, %v36
    %v95 = vpop.permute.xlu0 %94
    %97 = vset.pattern.permute.xlu0 2
    %98 = vperm.xlu0 %97, %v37
    %v99 = vpop.permute.xlu0 %98
    %101 = vset.pattern.permute.xlu0 2
    %102 = vperm.xlu0 %101, %v38
    %v103 = vpop.permute.xlu0 %102
    %v105 = vperm.slane %v34, 2
    %v106 = vmul.f32 %v91, %v105
    %v107 = vmul.f32 %v95, %v105
    %v108 = vmul.f32 %v99, %v105
    %v109 = vmul.f32 %v103, %v105
    %v110 = vadd.f32 %v85, %v106
    %v111 = vadd.f32 %v86, %v107
    %v112 = vadd.f32 %v87, %v108
    %v113 = vadd.f32 %v88, %v109
    %114 = vset.pattern.permute.xlu0 3
    %115 = vperm.xlu0 %114, %v35
    %v116 = vpop.permute.xlu0 %115
    %118 = vset.pattern.permute.xlu0 3
    %119 = vperm.xlu0 %118, %v36
    %v120 = vpop.permute.xlu0 %119
    %122 = vset.pattern.permute.xlu0 3
    %123 = vperm.xlu0 %122, %v37
    %v124 = vpop.permute.xlu0 %123
    %126 = vset.pattern.permute.xlu0 3
    %127 = vperm.xlu0 %126, %v38
    %v128 = vpop.permute.xlu0 %127
    %v130 = vperm.slane %v34, 3
    %v131 = vmul.f32 %v116, %v130
    %v132 = vmul.f32 %v120, %v130
    %v133 = vmul.f32 %v124, %v130
    %v134 = vmul.f32 %v128, %v130
    %v135 = vadd.f32 %v110, %v131
    %v136 = vadd.f32 %v111, %v132
    %v137 = vadd.f32 %v112, %v133
    %v138 = vadd.f32 %v113, %v134
    %v139 = vld [vmem:[%s2] sm:$0xff]
    %v140 = vld [vmem:[%s2 + $0x8] sm:$0xff]
    %v141 = vld [vmem:[%s2 + $0x10] sm:$0xff]
    %v142 = vld [vmem:[%s2 + $0x18] sm:$0xff]
    %144 = vset.pattern.permute.xlu0 0
    %145 = vperm.xlu0 %144, %v139
    %v146 = vpop.permute.xlu0 %145
    %149 = vset.pattern.permute.xlu0 0
    %150 = vperm.xlu0 %149, %v140
    %v151 = vpop.permute.xlu0 %150
    %154 = vset.pattern.permute.xlu0 0
    %155 = vperm.xlu0 %154, %v141
    %v156 = vpop.permute.xlu0 %155
    %159 = vset.pattern.permute.xlu0 0
    %160 = vperm.xlu0 %159, %v142
    %v161 = vpop.permute.xlu0 %160
    %v163 = vadd.f32 %v135, %v146
    %v164 = vadd.f32 %v136, %v151
    %v165 = vadd.f32 %v137, %v156
    %v166 = vadd.f32 %v138, %v161
    %v167 = vmax.f32 %v163, 0.0
    %v168 = vmax.f32 %v164, 0.0
    %v169 = vmax.f32 %v165, 0.0
    %v170 = vmax.f32 %v166, 0.0
    %v171 = vand.u32 2147483647, %v163
    %v172 = vand.u32 2147483647, %v164
    %v173 = vand.u32 2147483647, %v165
    %v174 = vand.u32 2147483647, %v166
    %v175 = vsub.f32 0.0, %v171
    %v176 = vsub.f32 0.0, %v172
    %v177 = vsub.f32 0.0, %v173
    %v178 = vsub.f32 0.0, %v174
    %v179 = vmul.f32 %v175, 1.442695
    %v180 = vpow.pop %v179
    %v181 = vmul.f32 %v176, 1.442695
    %v182 = vpow.pop %v181
    %v183 = vmul.f32 %v177, 1.442695
    %v184 = vpow.pop %v183
    %v185 = vmul.f32 %v178, 1.442695
    %v186 = vpow.pop %v185
    %v187 = vadd.f32 %v180, 1.0
    %v188 = vlog2.pop %v187
    %v189 = vmul.f32 %v188, 0.6931472
    %v190 = vmul.f32 -0.5, %v180
    %v191 = vadd.f32 %v190, 1.0
    %v192 = vmul.f32 %v191, %v180
    %v193 = vand.u32 2147483647, %v180
    %vm194 = vcmp.lt.f32.partialorder %v193, 0.0004427343
    %v195 = vsel %vm194, %v192, %v189
    %v196 = vadd.f32 %v182, 1.0
    %v197 = vlog2.pop %v196
    %v198 = vmul.f32 %v197, 0.6931472
    %v199 = vmul.f32 -0.5, %v182
    %v200 = vadd.f32 %v199, 1.0
    %v201 = vmul.f32 %v200, %v182
    %v202 = vand.u32 2147483647, %v182
    %vm203 = vcmp.lt.f32.partialorder %v202, 0.0004427343
    %v204 = vsel %vm203, %v201, %v198
    %v205 = vadd.f32 %v184, 1.0
    %v206 = vlog2.pop %v205
    %v207 = vmul.f32 %v206, 0.6931472
    %v208 = vmul.f32 -0.5, %v184
    %v209 = vadd.f32 %v208, 1.0
    %v210 = vmul.f32 %v209, %v184
    %v211 = vand.u32 2147483647, %v184
    %vm212 = vcmp.lt.f32.partialorder %v211, 0.0004427343
    %v213 = vsel %vm212, %v210, %v207
    %v214 = vadd.f32 %v186, 1.0
    %v215 = vlog2.pop %v214
    %v216 = vmul.f32 %v215, 0.6931472
    %v217 = vmul.f32 -0.5, %v186
    %v218 = vadd.f32 %v217, 1.0
    %v219 = vmul.f32 %v218, %v186
    %v220 = vand.u32 2147483647, %v186
    %vm221 = vcmp.lt.f32.partialorder %v220, 0.0004427343
    %v222 = vsel %vm221, %v219, %v216
    %v223 = vadd.f32 %v167, %v195
    %v224 = vadd.f32 %v168, %v204
    %v225 = vadd.f32 %v169, %v213
    %v226 = vadd.f32 %v170, %v222
    %v227 = vld [vmem:[%s3] sm:$0xff]
    %v228 = vld [vmem:[%s3 + $0x8] sm:$0xff]
    %v229 = vld [vmem:[%s3 + $0x10] sm:$0xff]
    %v230 = vld [vmem:[%s3 + $0x18] sm:$0xff]
    %v231 = vld [vmem:[%s4] sm:$0xff]
    %v232 = vld [vmem:[%s4 + $0x8] sm:$0xff]
    %v233 = vld [vmem:[%s4 + $0x10] sm:$0xff]
    %v234 = vld [vmem:[%s4 + $0x18] sm:$0xff]
    %236 = vset.pattern.permute.xlu0 0
    %237 = vperm.xlu0 %236, %v231
    %v238 = vpop.permute.xlu0 %237
    %241 = vset.pattern.permute.xlu0 0
    %242 = vperm.xlu0 %241, %v232
    %v243 = vpop.permute.xlu0 %242
    %246 = vset.pattern.permute.xlu0 0
    %247 = vperm.xlu0 %246, %v233
    %v248 = vpop.permute.xlu0 %247
    %251 = vset.pattern.permute.xlu0 0
    %252 = vperm.xlu0 %251, %v234
    %v253 = vpop.permute.xlu0 %252
    %vm255 = vcmask 261120
    %v257 = vsel %vm255, %v227, 0
    %v260 = vsel %vm255, %v228, 0
    %v263 = vsel %vm255, %v229, 0
    %v266 = vsel %vm255, %v230, 0
    %268 = vmatpush.msra.mxu0 0.0
    %269 = vmatpush.msra.mxu0 0.0
    %270 = vmatpush.msra.mxu0 0.0
    %271 = vmatpush.msra.mxu0 0.0
    %272 = vmatpush.msra.mxu0 0.0
    %273 = vmatpush.msra.mxu0 0.0
    %274 = vmatpush.msra.mxu0 0.0
    %275 = vmatpush.msra.mxu0 0.0
    %276 = vmatpush.msra.mxu0 0.0
    %277 = vmatpush.msra.mxu0 0.0
    %278 = vmatpush.msra.mxu0 0.0
    %279 = vmatpush.msra.mxu0 0.0
    %280 = vmatpush.msra.mxu0 %v226
    %281 = vmatpush.msra.mxu0 %v225
    %282 = vmatpush.msra.mxu0 %v224
    %283 = vmatpush.msra.mxu0 %v223
    %284 = vmatmul.f32.gmra.mxu0 %v257
    %v285 = vpop.f32.mrf.mxu0
    %v286 = vadd.f32 %v238, %v285
    %287 = vmatmul.f32.gmra.mxu0 %v260
    %v288 = vpop.f32.mrf.mxu0
    %v289 = vadd.f32 %v243, %v288
    %290 = vmatmul.f32.gmra.mxu0 %v263
    %v291 = vpop.f32.mrf.mxu0
    %v292 = vadd.f32 %v248, %v291
    %293 = vmatmul.f32.gmra.mxu0 %v266
    %v294 = vpop.f32.mrf.mxu0
    %v295 = vadd.f32 %v253, %v294
    %296 = vdwg.mxu0
    %v297 = vmax.f32 %v286, 0.0
    %v298 = vmax.f32 %v289, 0.0
    %v299 = vmax.f32 %v292, 0.0
    %v300 = vmax.f32 %v295, 0.0
    %v301 = vand.u32 2147483647, %v286
    %v302 = vand.u32 2147483647, %v289
    %v303 = vand.u32 2147483647, %v292
    %v304 = vand.u32 2147483647, %v295
    %v305 = vsub.f32 0.0, %v301
    %v306 = vsub.f32 0.0, %v302
    %v307 = vsub.f32 0.0, %v303
    %v308 = vsub.f32 0.0, %v304
    %v309 = vmul.f32 %v305, 1.442695
    %v310 = vpow.pop %v309
    %v311 = vmul.f32 %v306, 1.442695
    %v312 = vpow.pop %v311
    %v313 = vmul.f32 %v307, 1.442695
    %v314 = vpow.pop %v313
    %v315 = vmul.f32 %v308, 1.442695
    %v316 = vpow.pop %v315
    %v317 = vadd.f32 %v310, 1.0
    %v318 = vlog2.pop %v317
    %v319 = vmul.f32 %v318, 0.6931472
    %v320 = vmul.f32 -0.5, %v310
    %v321 = vadd.f32 %v320, 1.0
    %v322 = vmul.f32 %v321, %v310
    %v323 = vand.u32 2147483647, %v310
    %vm324 = vcmp.lt.f32.partialorder %v323, 0.0004427343
    %v325 = vsel %vm324, %v322, %v319
    %v326 = vadd.f32 %v312, 1.0
    %v327 = vlog2.pop %v326
    %v328 = vmul.f32 %v327, 0.6931472
    %v329 = vmul.f32 -0.5, %v312
    %v330 = vadd.f32 %v329, 1.0
    %v331 = vmul.f32 %v330, %v312
    %v332 = vand.u32 2147483647, %v312
    %vm333 = vcmp.lt.f32.partialorder %v332, 0.0004427343
    %v334 = vsel %vm333, %v331, %v328
    %v335 = vadd.f32 %v314, 1.0
    %v336 = vlog2.pop %v335
    %v337 = vmul.f32 %v336, 0.6931472
    %v338 = vmul.f32 -0.5, %v314
    %v339 = vadd.f32 %v338, 1.0
    %v340 = vmul.f32 %v339, %v314
    %v341 = vand.u32 2147483647, %v314
    %vm342 = vcmp.lt.f32.partialorder %v341, 0.0004427343
    %v343 = vsel %vm342, %v340, %v337
    %v344 = vadd.f32 %v316, 1.0
    %v345 = vlog2.pop %v344
    %v346 = vmul.f32 %v345, 0.6931472
    %v347 = vmul.f32 -0.5, %v316
    %v348 = vadd.f32 %v347, 1.0
    %v349 = vmul.f32 %v348, %v316
    %v350 = vand.u32 2147483647, %v316
    %vm351 = vcmp.lt.f32.partialorder %v350, 0.0004427343
    %v352 = vsel %vm351, %v349, %v346
    %v353 = vadd.f32 %v297, %v325
    %v354 = vadd.f32 %v298, %v334
    %v355 = vadd.f32 %v299, %v343
    %v356 = vadd.f32 %v300, %v352
    %v357 = vld [vmem:[%s5] sm:$0xff]
    %v358 = vld [vmem:[%s5 + $0x8] sm:$0xff]
    %v359 = vld [vmem:[%s5 + $0x10] sm:$0xff]
    %v360 = vld [vmem:[%s5 + $0x18] sm:$0xff]
    %v361 = vld [vmem:[%s6] sm:$0xff]
    %v362 = vld [vmem:[%s6 + $0x8] sm:$0xff]
    %v363 = vld [vmem:[%s6 + $0x10] sm:$0xff]
    %v364 = vld [vmem:[%s6 + $0x18] sm:$0xff]
    %366 = vset.pattern.permute.xlu0 0
    %367 = vperm.xlu0 %366, %v361
    %v368 = vpop.permute.xlu0 %367
    %371 = vset.pattern.permute.xlu0 0
    %372 = vperm.xlu0 %371, %v362
    %v373 = vpop.permute.xlu0 %372
    %376 = vset.pattern.permute.xlu0 0
    %377 = vperm.xlu0 %376, %v363
    %v378 = vpop.permute.xlu0 %377
    %381 = vset.pattern.permute.xlu0 0
    %382 = vperm.xlu0 %381, %v364
    %v383 = vpop.permute.xlu0 %382
    %v386 = vsel %vm255, %v357, 0
    %v389 = vsel %vm255, %v358, 0
    %v392 = vsel %vm255, %v359, 0
    %v395 = vsel %vm255, %v360, 0
    %397 = vmatpush.msra.mxu0 0.0
    %398 = vmatpush.msra.mxu0 0.0
    %399 = vmatpush.msra.mxu0 0.0
    %400 = vmatpush.msra.mxu0 0.0
    %401 = vmatpush.msra.mxu0 0.0
    %402 = vmatpush.msra.mxu0 0.0
    %403 = vmatpush.msra.mxu0 0.0
    %404 = vmatpush.msra.mxu0 0.0
    %405 = vmatpush.msra.mxu0 0.0
    %406 = vmatpush.msra.mxu0 0.0
    %407 = vmatpush.msra.mxu0 0.0
    %408 = vmatpush.msra.mxu0 0.0
    %409 = vmatpush.msra.mxu0 %v356
    %410 = vmatpush.msra.mxu0 %v355
    %411 = vmatpush.msra.mxu0 %v354
    %412 = vmatpush.msra.mxu0 %v353
    %413 = vmatmul.f32.gmra.mxu0 %v386
    %v414 = vpop.f32.mrf.mxu0
    %v415 = vadd.f32 %v368, %v414
    %416 = vmatmul.f32.gmra.mxu0 %v389
    %v417 = vpop.f32.mrf.mxu0
    %v418 = vadd.f32 %v373, %v417
    %419 = vmatmul.f32.gmra.mxu0 %v392
    %v420 = vpop.f32.mrf.mxu0
    %v421 = vadd.f32 %v378, %v420
    %422 = vmatmul.f32.gmra.mxu0 %v395
    %v423 = vpop.f32.mrf.mxu0
    %v424 = vadd.f32 %v383, %v423
    %425 = vdwg.mxu0
    %v426 = vmax.f32 %v415, 0.0
    %v427 = vmax.f32 %v418, 0.0
    %v428 = vmax.f32 %v421, 0.0
    %v429 = vmax.f32 %v424, 0.0
    %v430 = vand.u32 2147483647, %v415
    %v431 = vand.u32 2147483647, %v418
    %v432 = vand.u32 2147483647, %v421
    %v433 = vand.u32 2147483647, %v424
    %v434 = vsub.f32 0.0, %v430
    %v435 = vsub.f32 0.0, %v431
    %v436 = vsub.f32 0.0, %v432
    %v437 = vsub.f32 0.0, %v433
    %v438 = vmul.f32 %v434, 1.442695
    %v439 = vpow.pop %v438
    %v440 = vmul.f32 %v435, 1.442695
    %v441 = vpow.pop %v440
    %v442 = vmul.f32 %v436, 1.442695
    %v443 = vpow.pop %v442
    %v444 = vmul.f32 %v437, 1.442695
    %v445 = vpow.pop %v444
    %v446 = vadd.f32 %v439, 1.0
    %v447 = vlog2.pop %v446
    %v448 = vmul.f32 %v447, 0.6931472
    %v449 = vmul.f32 -0.5, %v439
    %v450 = vadd.f32 %v449, 1.0
    %v451 = vmul.f32 %v450, %v439
    %v452 = vand.u32 2147483647, %v439
    %vm453 = vcmp.lt.f32.partialorder %v452, 0.0004427343
    %v454 = vsel %vm453, %v451, %v448
    %v455 = vadd.f32 %v441, 1.0
    %v456 = vlog2.pop %v455
    %v457 = vmul.f32 %v456, 0.6931472
    %v458 = vmul.f32 -0.5, %v441
    %v459 = vadd.f32 %v458, 1.0
    %v460 = vmul.f32 %v459, %v441
    %v461 = vand.u32 2147483647, %v441
    %vm462 = vcmp.lt.f32.partialorder %v461, 0.0004427343
    %v463 = vsel %vm462, %v460, %v457
    %v464 = vadd.f32 %v443, 1.0
    %v465 = vlog2.pop %v464
    %v466 = vmul.f32 %v465, 0.6931472
    %v467 = vmul.f32 -0.5, %v443
    %v468 = vadd.f32 %v467, 1.0
    %v469 = vmul.f32 %v468, %v443
    %v470 = vand.u32 2147483647, %v443
    %vm471 = vcmp.lt.f32.partialorder %v470, 0.0004427343
    %v472 = vsel %vm471, %v469, %v466
    %v473 = vadd.f32 %v445, 1.0
    %v474 = vlog2.pop %v473
    %v475 = vmul.f32 %v474, 0.6931472
    %v476 = vmul.f32 -0.5, %v445
    %v477 = vadd.f32 %v476, 1.0
    %v478 = vmul.f32 %v477, %v445
    %v479 = vand.u32 2147483647, %v445
    %vm480 = vcmp.lt.f32.partialorder %v479, 0.0004427343
    %v481 = vsel %vm480, %v478, %v475
    %v482 = vadd.f32 %v426, %v454
    %v483 = vadd.f32 %v427, %v463
    %v484 = vadd.f32 %v428, %v472
    %v485 = vadd.f32 %v429, %v481
    %v486 = vld [vmem:[%s7] sm:$0xff]
    %v487 = vld [vmem:[%s7 + $0x8] sm:$0xff]
    %v488 = vld [vmem:[%s7 + $0x10] sm:$0xff]
    %v489 = vld [vmem:[%s7 + $0x18] sm:$0xff]
    %491 = vset.pattern.permute.xlu0 0
    %492 = vperm.xlu0 %491, %v486
    %v493 = vpop.permute.xlu0 %492
    %496 = vset.pattern.permute.xlu0 0
    %497 = vperm.xlu0 %496, %v487
    %v498 = vpop.permute.xlu0 %497
    %501 = vset.pattern.permute.xlu0 0
    %502 = vperm.xlu0 %501, %v488
    %v503 = vpop.permute.xlu0 %502
    %506 = vset.pattern.permute.xlu0 0
    %507 = vperm.xlu0 %506, %v489
    %v508 = vpop.permute.xlu0 %507
    %v510 = vmul.f32 %v482, %v493
    %v511 = vmul.f32 %v483, %v498
    %v512 = vmul.f32 %v484, %v503
    %v513 = vmul.f32 %v485, %v508
    %v514 = vadd.f32 %v510, %v511
    %v515 = vadd.f32 %v514, %v512
    %v516 = vadd.f32 %v515, %v513
    %v517 = vrot.slane %v516, 4
    %v518 = vadd.f32 %v516, %v517
    %v519 = vrot.slane %v518, 2
    %v520 = vadd.f32 %v518, %v519
    %v521 = vrot.slane %v520, 1
    %v522 = vadd.f32 %v520, %v521
    %s523 = sld [smem:[#allocation2]]
    %v524 = vstv %s523
    %v525 = vadd.f32 %v522, %v524
    %v526 = vsub.f32 0.0, %v525
    %v527 = vmul.f32 %v526, 1.442695
    %v528 = vpow.pop %v527
    %v529 = vadd.f32 %v528, 1.0
    %v530 = vrcp.pop %v529
    %531 = vst [vmem:[#allocation3] sm:$0x1] %v530
    // Predicated region
    $region38: #{tpu_custom_call.1} parent=1 // pred_check
      _
    $region39: #{tpu_custom_call.1} parent=1 // pred_check_branch
      %533 = sbr.rel (0) target = $region41
    $region40: #{tpu_custom_call.1} parent=1 // pred_region
      %535 = vsyncadd [#allocation4], 0
      %s537 = sshll.u32 [#allocation3], 4
      %s538 = int_to_ptr.vmem [resolvable:$true] %s537
      %s539 = sshll.u32 %s9, 4
      %s540 = int_to_ptr.hbm [resolvable:$true] %s539
      %542 = dma.vmem_to_hbm [thread:$0]  %s538, 16, %s540, [#allocation4]
    $region41: #{tpu_custom_call.1} parent=1 // pred_fallthru
      _
    // Predicated region
    $region42: #{tpu_custom_call.1} parent=1 // pred_check
      _
    $region43: #{tpu_custom_call.1} parent=1 // pred_check_branch
      %544 = sbr.rel (0) target = $region45
    $region44: #{tpu_custom_call.1} parent=1 // pred_region
      %546 = dma.done [#allocation4], 16
    $region45: #{tpu_custom_call.1} parent=1 // pred_fallthru
      _
    %547 = vsyncpa [#allocation4], 1

</llo_original>
